<compile_context>
chip_gen: v7x
topology: tpu7x:2x2x1
jax: 0.10.0
libtpu: 0.0.40
codegen_flags: <defaults>
</compile_context>

<pallas_src>
import jax
import jax.numpy as jnp
from jax import lax
from jax.experimental import pallas as pl
from jax.experimental.pallas import tpu as pltpu


# ----------------------------- Pallas kernel -------------------------------

def bilstm_kernel(xg_ref,     # (T, B, 4H) fwd  pre-activations: W_ih[x_t] + bias
                  whh_f_ref,  # (H, 4H)    fwd  hidden->gates (pre-transposed)
                  xgb_ref,    # (B, 4H)    rev  pre-activations at t = T-1
                  w1_ref,     # (2H, FC)   fc1 weight (pre-transposed)
                  b1_ref,     # (1, FC)
                  w2_ref,     # (FC, OUT)  fc2 weight (pre-transposed)
                  b2_ref,     # (1, OUT)
                  out_ref):   # (B, OUT)
    T, B, G = xg_ref.shape
    H = G // 4

    # PyTorch LSTM gate order along the 4H lane axis: [i | f | g | o].
    # One lane mask (hoisted) lets us run a single full-width tanh + sigmoid
    # per step instead of four quarter-vreg transcendentals.
    lane = lax.broadcasted_iota(jnp.int32, (B, G), 1)
    is_g_lane = (lane >= 2 * H) & (lane < 3 * H)

    def activate(gates):  # (B, 4H) -> (B, 4H)
        return jnp.where(is_g_lane, jnp.tanh(gates), jax.nn.sigmoid(gates))

    # ---- forward direction: full recurrence, h/c carried in vregs ----
    def step(t, carry):
        h, c = carry
        gates = xg_ref[t] + jnp.dot(h, whh_f_ref[...],
                                    preferred_element_type=jnp.float32)
        act = activate(gates)
        i_g = act[:, 0:H]
        f_g = act[:, H:2 * H]
        g_g = act[:, 2 * H:3 * H]
        o_g = act[:, 3 * H:4 * H]
        c_new = f_g * c + i_g * g_g
        h_new = o_g * jnp.tanh(c_new)
        return h_new, c_new

    h0 = jnp.zeros((B, H), jnp.float32)
    c0 = jnp.zeros((B, H), jnp.float32)
    h_fwd, _ = lax.fori_loop(0, T, step, (h0, c0), unroll=True)

    # ---- reverse direction: out[:, T-1] is a single reverse step from zero
    #      state, so the f-gate term (f * c0) and h0 @ W_hh_reverse vanish. ----
    act_b = activate(xgb_ref[...])
    i_b = act_b[:, 0:H]
    g_b = act_b[:, 2 * H:3 * H]
    o_b = act_b[:, 3 * H:4 * H]
    h_bwd = o_b * jnp.tanh(i_b * g_b)

    # ---- fc head: Linear(2H, FC) -> ReLU -> Linear(FC, OUT), fc1 fused ----
    cat = jnp.concatenate([h_fwd, h_bwd], axis=1)                 # (B, 2H)
    hid = jnp.dot(cat, w1_ref[...],
                  preferred_element_type=jnp.float32) + b1_ref[...]
    hid = jnp.maximum(hid, 0.0)
    out_ref[...] = (jnp.dot(hid, w2_ref[...],
                            preferred_element_type=jnp.float32) + b2_ref[...])


# ------------------------------- wrapper ------------------------------------

def bilstm_forward(X, params):
    """X: (B, T) int32 token indices. Returns (B, OUT) float32."""
    B, T = X.shape
    H = params["whh_f"].shape[0]
    OUT = params["w2"].shape[1]
    B_pad = max(8, ((B + 7) // 8) * 8)        # fill whole sublanes

    Xi = X.astype(jnp.int32)

    # One-hot matmul elimination: x_t @ W_ih == W_ih[token]; fold biases
    # (b_ih + b_hh, pre-summed in params) into the gathered pre-activations.
    xg = jnp.take(params["wih_f"], Xi, axis=0) + params["b_f"]          # (B, T, 4H)
    xg = jnp.transpose(xg, (1, 0, 2))                                   # (T, B, 4H)
    xgb = jnp.take(params["wih_b"], Xi[:, T - 1], axis=0) + params["b_b"]  # (B, 4H)

    if B_pad != B:
        xg = jnp.pad(xg, ((0, 0), (0, B_pad - B), (0, 0)))
        xgb = jnp.pad(xgb, ((0, B_pad - B), (0, 0)))

    args = (xg, params["whh_f"], xgb,
            params["w1"], params["b1"], params["w2"], params["b2"])

    vmem = pl.BlockSpec(memory_space=pltpu.MemorySpace.VMEM)
    out = pl.pallas_call(
        bilstm_kernel,
        out_shape=jax.ShapeDtypeStruct((B_pad, OUT), jnp.float32),
        in_specs=[vmem] * len(args),
        out_specs=vmem,
    )(*args)
    return out[:B]


# ------------------------- deterministic parameters -------------------------

def make_params(key, D, H, FC, OUT):
    ks = jax.random.split(key, 10)
    s = 0.1
    return {
        # LSTM weights stored pre-transposed: gates = x @ W_ih + h @ W_hh + b
        # b_f / b_b are the SUMMED PyTorch biases (b_ih + b_hh).
        "wih_f": (jax.random.normal(ks[0], (D, 4 * H)) * s).astype(jnp.float32),
        "whh_f": (jax.random.normal(ks[1], (H, 4 * H)) * s).astype(jnp.float32),
        "b_f":   (jax.random.normal(ks[2], (1, 4 * H)) * s).astype(jnp.float32),
        "wih_b": (jax.random.normal(ks[3], (D, 4 * H)) * s).astype(jnp.float32),
        # weight_hh_reverse exists in nn.LSTM but cannot affect out[:, T-1]
        # (zero initial reverse state); kept only for the reference check.
        "whh_b": (jax.random.normal(ks[4], (H, 4 * H)) * s).astype(jnp.float32),
        "b_b":   (jax.random.normal(ks[5], (1, 4 * H)) * s).astype(jnp.float32),
        # fc head (weights stored transposed: y = x @ W + b)
        "w1": (jax.random.normal(ks[6], (2 * H, FC)) * s).astype(jnp.float32),
        "b1": (jax.random.normal(ks[7], (1, FC)) * s).astype(jnp.float32),
        "w2": (jax.random.normal(ks[8], (FC, OUT)) * s).astype(jnp.float32),
        "b2": (jax.random.normal(ks[9], (1, OUT)) * s).astype(jnp.float32),
    }


# ----------------------------- pure-JAX reference ---------------------------

def ref_forward(X, params):
    B, T = X.shape
    D = params["wih_f"].shape[0]
    H = params["whh_f"].shape[0]
    onehot = jax.nn.one_hot(X, D, dtype=jnp.float32)                 # (B, T, D)

    def cell(xt, h, c, wih, whh, b):
        g = xt @ wih + h @ whh + b
        i = jax.nn.sigmoid(g[:, :H])
        f = jax.nn.sigmoid(g[:, H:2 * H])
        gg = jnp.tanh(g[:, 2 * H:3 * H])
        o = jax.nn.sigmoid(g[:, 3 * H:4 * H])
        c = f * c + i * gg
        return o * jnp.tanh(c), c

    h = jnp.zeros((B, H), jnp.float32)
    c = jnp.zeros((B, H), jnp.float32)
    for t in range(T):
        h, c = cell(onehot[:, t], h, c,
                    params["wih_f"], params["whh_f"], params["b_f"])
    h_fwd = h

    # reverse direction output at position T-1 == first reverse step from zero
    h0 = jnp.zeros((B, H), jnp.float32)
    c0 = jnp.zeros((B, H), jnp.float32)
    h_bwd, _ = cell(onehot[:, T - 1], h0, c0,
                    params["wih_b"], params["whh_b"], params["b_b"])

    cat = jnp.concatenate([h_fwd, h_bwd], axis=-1)
    hid = jnp.maximum(cat @ params["w1"] + params["b1"], 0.0)
    return hid @ params["w2"] + params["b2"]


# --------------------------------- main --------------------------------------

if __name__ == "__main__":
    B, T = 3, 8            # 3 sequences (as in the module docstring), length 8
    D = 32                 # input_size (one-hot vocabulary depth)
    H = 32                 # hidden_dim
    FC = 30                # fixed fc_size in the module
    OUT = 8                # output_size

    key = jax.random.PRNGKey(0)
    kx, kp = jax.random.split(key)
    X = jax.random.randint(kx, (B, T), 0, D, dtype=jnp.int32)
    params = make_params(kp, D, H, FC, OUT)

    out = jax.block_until_ready(bilstm_forward(X, params))
    ref = ref_forward(X, params)

    if out.shape != (B, OUT):
        raise RuntimeError(f"bad output shape {out.shape}")
    if not jnp.allclose(out, ref, rtol=1e-4, atol=1e-4):
        raise RuntimeError("Pallas kernel does not match JAX reference")

    print("KERNEL_OK")
</pallas_src>

<mosaic_0001>
module attributes {stable_mosaic.version = 11 : i64} {
  func.func @bilstm_kernel(%arg0: memref<8x8x128xf32, #tpu.memory_space<vmem>>, %arg1: memref<32x128xf32, #tpu.memory_space<vmem>>, %arg2: memref<8x128xf32, #tpu.memory_space<vmem>>, %arg3: memref<64x30xf32, #tpu.memory_space<vmem>>, %arg4: memref<1x30xf32, #tpu.memory_space<vmem>>, %arg5: memref<30x8xf32, #tpu.memory_space<vmem>>, %arg6: memref<1x8xf32, #tpu.memory_space<vmem>>, %arg7: memref<8x8xf32, #tpu.memory_space<vmem>>) attributes {dimension_semantics = [], scalar_prefetch = 0 : i64, scratch_operands = 0 : i64, tpu.core_type = #tpu.core_type<tc>} {
    %0 = tpu.iota {dimensions = array<i32: 1>} : vector<8x128xi32>
    %c64_i32 = arith.constant 64 : i32
    %1 = vector.broadcast %c64_i32 : i32 to vector<8x128xi32>
    %2 = arith.cmpi sge, %0, %1 : vector<8x128xi32>
    %c96_i32 = arith.constant 96 : i32
    %3 = vector.broadcast %c96_i32 : i32 to vector<8x128xi32>
    %4 = arith.cmpi slt, %0, %3 : vector<8x128xi32>
    %5 = arith.andi %2, %4 : vector<8x128xi1>
    %cst = arith.constant 0.000000e+00 : f32
    %6 = vector.broadcast %cst : f32 to vector<8x32xf32>
    %cst_0 = arith.constant 0.000000e+00 : f32
    %7 = vector.broadcast %cst_0 : f32 to vector<8x32xf32>
    %c0_i32 = arith.constant 0 : i32
    %8 = arith.index_cast %c0_i32 : i32 to index
    %c0 = arith.constant 0 : index
    %c0_1 = arith.constant 0 : index
    %9 = vector.load %arg0[%8, %c0, %c0_1] : memref<8x8x128xf32, #tpu.memory_space<vmem>>, vector<1x8x128xf32>
    %10 = vector.shape_cast %9 : vector<1x8x128xf32> to vector<8x128xf32>
    %c0_2 = arith.constant 0 : index
    %c0_3 = arith.constant 0 : index
    %11 = vector.load %arg1[%c0_2, %c0_3] : memref<32x128xf32, #tpu.memory_space<vmem>>, vector<32x128xf32>
    %cst_4 = arith.constant dense<0.000000e+00> : vector<8x128xf32>
    %12 = tpu.matmul %6, %11, %cst_4 {dimension_numbers = #tpu.dot_dimension_numbers<[1], [0], [0], [1], [0, 0, 1, 1], [], []>} : vector<8x32xf32>, vector<32x128xf32>, vector<8x128xf32> -> vector<8x128xf32>
    %13 = arith.addf %10, %12 : vector<8x128xf32>
    %14 = math.tanh %13 : vector<8x128xf32>
    %15 = arith.negf %13 : vector<8x128xf32>
    %16 = math.exp %15 : vector<8x128xf32>
    %cst_5 = arith.constant 1.000000e+00 : f32
    %17 = vector.broadcast %cst_5 : f32 to vector<8x128xf32>
    %18 = arith.addf %17, %16 : vector<8x128xf32>
    %19 = arith.divf %17, %18 : vector<8x128xf32>
    %20 = arith.select %5, %14, %19 : vector<8x128xi1>, vector<8x128xf32>
    %21 = vector.extract_strided_slice %20 {offsets = [0, 0], sizes = [8, 32], strides = [1, 1]} : vector<8x128xf32> to vector<8x32xf32>
    %22 = vector.extract_strided_slice %20 {offsets = [0, 32], sizes = [8, 32], strides = [1, 1]} : vector<8x128xf32> to vector<8x32xf32>
    %23 = vector.extract_strided_slice %20 {offsets = [0, 64], sizes = [8, 32], strides = [1, 1]} : vector<8x128xf32> to vector<8x32xf32>
    %24 = vector.extract_strided_slice %20 {offsets = [0, 96], sizes = [8, 32], strides = [1, 1]} : vector<8x128xf32> to vector<8x32xf32>
    %25 = arith.mulf %22, %7 : vector<8x32xf32>
    %26 = arith.mulf %21, %23 : vector<8x32xf32>
    %27 = arith.addf %25, %26 : vector<8x32xf32>
    %28 = math.tanh %27 : vector<8x32xf32>
    %29 = arith.mulf %24, %28 : vector<8x32xf32>
    %c1_i32 = arith.constant 1 : i32
    %30 = arith.index_cast %c1_i32 : i32 to index
    %c0_6 = arith.constant 0 : index
    %c0_7 = arith.constant 0 : index
    %31 = vector.load %arg0[%30, %c0_6, %c0_7] : memref<8x8x128xf32, #tpu.memory_space<vmem>>, vector<1x8x128xf32>
    %32 = vector.shape_cast %31 : vector<1x8x128xf32> to vector<8x128xf32>
    %c0_8 = arith.constant 0 : index
    %c0_9 = arith.constant 0 : index
    %33 = vector.load %arg1[%c0_8, %c0_9] : memref<32x128xf32, #tpu.memory_space<vmem>>, vector<32x128xf32>
    %cst_10 = arith.constant dense<0.000000e+00> : vector<8x128xf32>
    %34 = tpu.matmul %29, %33, %cst_10 {dimension_numbers = #tpu.dot_dimension_numbers<[1], [0], [0], [1], [0, 0, 1, 1], [], []>} : vector<8x32xf32>, vector<32x128xf32>, vector<8x128xf32> -> vector<8x128xf32>
    %35 = arith.addf %32, %34 : vector<8x128xf32>
    %36 = math.tanh %35 : vector<8x128xf32>
    %37 = arith.negf %35 : vector<8x128xf32>
    %38 = math.exp %37 : vector<8x128xf32>
    %cst_11 = arith.constant 1.000000e+00 : f32
    %39 = vector.broadcast %cst_11 : f32 to vector<8x128xf32>
    %40 = arith.addf %39, %38 : vector<8x128xf32>
    %41 = arith.divf %39, %40 : vector<8x128xf32>
    %42 = arith.select %5, %36, %41 : vector<8x128xi1>, vector<8x128xf32>
    %43 = vector.extract_strided_slice %42 {offsets = [0, 0], sizes = [8, 32], strides = [1, 1]} : vector<8x128xf32> to vector<8x32xf32>
    %44 = vector.extract_strided_slice %42 {offsets = [0, 32], sizes = [8, 32], strides = [1, 1]} : vector<8x128xf32> to vector<8x32xf32>
    %45 = vector.extract_strided_slice %42 {offsets = [0, 64], sizes = [8, 32], strides = [1, 1]} : vector<8x128xf32> to vector<8x32xf32>
    %46 = vector.extract_strided_slice %42 {offsets = [0, 96], sizes = [8, 32], strides = [1, 1]} : vector<8x128xf32> to vector<8x32xf32>
    %47 = arith.mulf %44, %27 : vector<8x32xf32>
    %48 = arith.mulf %43, %45 : vector<8x32xf32>
    %49 = arith.addf %47, %48 : vector<8x32xf32>
    %50 = math.tanh %49 : vector<8x32xf32>
    %51 = arith.mulf %46, %50 : vector<8x32xf32>
    %c2_i32 = arith.constant 2 : i32
    %52 = arith.index_cast %c2_i32 : i32 to index
    %c0_12 = arith.constant 0 : index
    %c0_13 = arith.constant 0 : index
    %53 = vector.load %arg0[%52, %c0_12, %c0_13] : memref<8x8x128xf32, #tpu.memory_space<vmem>>, vector<1x8x128xf32>
    %54 = vector.shape_cast %53 : vector<1x8x128xf32> to vector<8x128xf32>
    %c0_14 = arith.constant 0 : index
    %c0_15 = arith.constant 0 : index
    %55 = vector.load %arg1[%c0_14, %c0_15] : memref<32x128xf32, #tpu.memory_space<vmem>>, vector<32x128xf32>
    %cst_16 = arith.constant dense<0.000000e+00> : vector<8x128xf32>
    %56 = tpu.matmul %51, %55, %cst_16 {dimension_numbers = #tpu.dot_dimension_numbers<[1], [0], [0], [1], [0, 0, 1, 1], [], []>} : vector<8x32xf32>, vector<32x128xf32>, vector<8x128xf32> -> vector<8x128xf32>
    %57 = arith.addf %54, %56 : vector<8x128xf32>
    %58 = math.tanh %57 : vector<8x128xf32>
    %59 = arith.negf %57 : vector<8x128xf32>
    %60 = math.exp %59 : vector<8x128xf32>
    %cst_17 = arith.constant 1.000000e+00 : f32
    %61 = vector.broadcast %cst_17 : f32 to vector<8x128xf32>
    %62 = arith.addf %61, %60 : vector<8x128xf32>
    %63 = arith.divf %61, %62 : vector<8x128xf32>
    %64 = arith.select %5, %58, %63 : vector<8x128xi1>, vector<8x128xf32>
    %65 = vector.extract_strided_slice %64 {offsets = [0, 0], sizes = [8, 32], strides = [1, 1]} : vector<8x128xf32> to vector<8x32xf32>
    %66 = vector.extract_strided_slice %64 {offsets = [0, 32], sizes = [8, 32], strides = [1, 1]} : vector<8x128xf32> to vector<8x32xf32>
    %67 = vector.extract_strided_slice %64 {offsets = [0, 64], sizes = [8, 32], strides = [1, 1]} : vector<8x128xf32> to vector<8x32xf32>
    %68 = vector.extract_strided_slice %64 {offsets = [0, 96], sizes = [8, 32], strides = [1, 1]} : vector<8x128xf32> to vector<8x32xf32>
    %69 = arith.mulf %66, %49 : vector<8x32xf32>
    %70 = arith.mulf %65, %67 : vector<8x32xf32>
    %71 = arith.addf %69, %70 : vector<8x32xf32>
    %72 = math.tanh %71 : vector<8x32xf32>
    %73 = arith.mulf %68, %72 : vector<8x32xf32>
    %c3_i32 = arith.constant 3 : i32
    %74 = arith.index_cast %c3_i32 : i32 to index
    %c0_18 = arith.constant 0 : index
    %c0_19 = arith.constant 0 : index
    %75 = vector.load %arg0[%74, %c0_18, %c0_19] : memref<8x8x128xf32, #tpu.memory_space<vmem>>, vector<1x8x128xf32>
    %76 = vector.shape_cast %75 : vector<1x8x128xf32> to vector<8x128xf32>
    %c0_20 = arith.constant 0 : index
    %c0_21 = arith.constant 0 : index
    %77 = vector.load %arg1[%c0_20, %c0_21] : memref<32x128xf32, #tpu.memory_space<vmem>>, vector<32x128xf32>
    %cst_22 = arith.constant dense<0.000000e+00> : vector<8x128xf32>
    %78 = tpu.matmul %73, %77, %cst_22 {dimension_numbers = #tpu.dot_dimension_numbers<[1], [0], [0], [1], [0, 0, 1, 1], [], []>} : vector<8x32xf32>, vector<32x128xf32>, vector<8x128xf32> -> vector<8x128xf32>
    %79 = arith.addf %76, %78 : vector<8x128xf32>
    %80 = math.tanh %79 : vector<8x128xf32>
    %81 = arith.negf %79 : vector<8x128xf32>
    %82 = math.exp %81 : vector<8x128xf32>
    %cst_23 = arith.constant 1.000000e+00 : f32
    %83 = vector.broadcast %cst_23 : f32 to vector<8x128xf32>
    %84 = arith.addf %83, %82 : vector<8x128xf32>
    %85 = arith.divf %83, %84 : vector<8x128xf32>
    %86 = arith.select %5, %80, %85 : vector<8x128xi1>, vector<8x128xf32>
    %87 = vector.extract_strided_slice %86 {offsets = [0, 0], sizes = [8, 32], strides = [1, 1]} : vector<8x128xf32> to vector<8x32xf32>
    %88 = vector.extract_strided_slice %86 {offsets = [0, 32], sizes = [8, 32], strides = [1, 1]} : vector<8x128xf32> to vector<8x32xf32>
    %89 = vector.extract_strided_slice %86 {offsets = [0, 64], sizes = [8, 32], strides = [1, 1]} : vector<8x128xf32> to vector<8x32xf32>
    %90 = vector.extract_strided_slice %86 {offsets = [0, 96], sizes = [8, 32], strides = [1, 1]} : vector<8x128xf32> to vector<8x32xf32>
    %91 = arith.mulf %88, %71 : vector<8x32xf32>
    %92 = arith.mulf %87, %89 : vector<8x32xf32>
    %93 = arith.addf %91, %92 : vector<8x32xf32>
    %94 = math.tanh %93 : vector<8x32xf32>
    %95 = arith.mulf %90, %94 : vector<8x32xf32>
    %c4_i32 = arith.constant 4 : i32
    %96 = arith.index_cast %c4_i32 : i32 to index
    %c0_24 = arith.constant 0 : index
    %c0_25 = arith.constant 0 : index
    %97 = vector.load %arg0[%96, %c0_24, %c0_25] : memref<8x8x128xf32, #tpu.memory_space<vmem>>, vector<1x8x128xf32>
    %98 = vector.shape_cast %97 : vector<1x8x128xf32> to vector<8x128xf32>
    %c0_26 = arith.constant 0 : index
    %c0_27 = arith.constant 0 : index
    %99 = vector.load %arg1[%c0_26, %c0_27] : memref<32x128xf32, #tpu.memory_space<vmem>>, vector<32x128xf32>
    %cst_28 = arith.constant dense<0.000000e+00> : vector<8x128xf32>
    %100 = tpu.matmul %95, %99, %cst_28 {dimension_numbers = #tpu.dot_dimension_numbers<[1], [0], [0], [1], [0, 0, 1, 1], [], []>} : vector<8x32xf32>, vector<32x128xf32>, vector<8x128xf32> -> vector<8x128xf32>
    %101 = arith.addf %98, %100 : vector<8x128xf32>
    %102 = math.tanh %101 : vector<8x128xf32>
    %103 = arith.negf %101 : vector<8x128xf32>
    %104 = math.exp %103 : vector<8x128xf32>
    %cst_29 = arith.constant 1.000000e+00 : f32
    %105 = vector.broadcast %cst_29 : f32 to vector<8x128xf32>
    %106 = arith.addf %105, %104 : vector<8x128xf32>
    %107 = arith.divf %105, %106 : vector<8x128xf32>
    %108 = arith.select %5, %102, %107 : vector<8x128xi1>, vector<8x128xf32>
    %109 = vector.extract_strided_slice %108 {offsets = [0, 0], sizes = [8, 32], strides = [1, 1]} : vector<8x128xf32> to vector<8x32xf32>
    %110 = vector.extract_strided_slice %108 {offsets = [0, 32], sizes = [8, 32], strides = [1, 1]} : vector<8x128xf32> to vector<8x32xf32>
    %111 = vector.extract_strided_slice %108 {offsets = [0, 64], sizes = [8, 32], strides = [1, 1]} : vector<8x128xf32> to vector<8x32xf32>
    %112 = vector.extract_strided_slice %108 {offsets = [0, 96], sizes = [8, 32], strides = [1, 1]} : vector<8x128xf32> to vector<8x32xf32>
    %113 = arith.mulf %110, %93 : vector<8x32xf32>
    %114 = arith.mulf %109, %111 : vector<8x32xf32>
    %115 = arith.addf %113, %114 : vector<8x32xf32>
    %116 = math.tanh %115 : vector<8x32xf32>
    %117 = arith.mulf %112, %116 : vector<8x32xf32>
    %c5_i32 = arith.constant 5 : i32
    %118 = arith.index_cast %c5_i32 : i32 to index
    %c0_30 = arith.constant 0 : index
    %c0_31 = arith.constant 0 : index
    %119 = vector.load %arg0[%118, %c0_30, %c0_31] : memref<8x8x128xf32, #tpu.memory_space<vmem>>, vector<1x8x128xf32>
    %120 = vector.shape_cast %119 : vector<1x8x128xf32> to vector<8x128xf32>
    %c0_32 = arith.constant 0 : index
    %c0_33 = arith.constant 0 : index
    %121 = vector.load %arg1[%c0_32, %c0_33] : memref<32x128xf32, #tpu.memory_space<vmem>>, vector<32x128xf32>
    %cst_34 = arith.constant dense<0.000000e+00> : vector<8x128xf32>
    %122 = tpu.matmul %117, %121, %cst_34 {dimension_numbers = #tpu.dot_dimension_numbers<[1], [0], [0], [1], [0, 0, 1, 1], [], []>} : vector<8x32xf32>, vector<32x128xf32>, vector<8x128xf32> -> vector<8x128xf32>
    %123 = arith.addf %120, %122 : vector<8x128xf32>
    %124 = math.tanh %123 : vector<8x128xf32>
    %125 = arith.negf %123 : vector<8x128xf32>
    %126 = math.exp %125 : vector<8x128xf32>
    %cst_35 = arith.constant 1.000000e+00 : f32
    %127 = vector.broadcast %cst_35 : f32 to vector<8x128xf32>
    %128 = arith.addf %127, %126 : vector<8x128xf32>
    %129 = arith.divf %127, %128 : vector<8x128xf32>
    %130 = arith.select %5, %124, %129 : vector<8x128xi1>, vector<8x128xf32>
    %131 = vector.extract_strided_slice %130 {offsets = [0, 0], sizes = [8, 32], strides = [1, 1]} : vector<8x128xf32> to vector<8x32xf32>
    %132 = vector.extract_strided_slice %130 {offsets = [0, 32], sizes = [8, 32], strides = [1, 1]} : vector<8x128xf32> to vector<8x32xf32>
    %133 = vector.extract_strided_slice %130 {offsets = [0, 64], sizes = [8, 32], strides = [1, 1]} : vector<8x128xf32> to vector<8x32xf32>
    %134 = vector.extract_strided_slice %130 {offsets = [0, 96], sizes = [8, 32], strides = [1, 1]} : vector<8x128xf32> to vector<8x32xf32>
    %135 = arith.mulf %132, %115 : vector<8x32xf32>
    %136 = arith.mulf %131, %133 : vector<8x32xf32>
    %137 = arith.addf %135, %136 : vector<8x32xf32>
    %138 = math.tanh %137 : vector<8x32xf32>
    %139 = arith.mulf %134, %138 : vector<8x32xf32>
    %c6_i32 = arith.constant 6 : i32
    %140 = arith.index_cast %c6_i32 : i32 to index
    %c0_36 = arith.constant 0 : index
    %c0_37 = arith.constant 0 : index
    %141 = vector.load %arg0[%140, %c0_36, %c0_37] : memref<8x8x128xf32, #tpu.memory_space<vmem>>, vector<1x8x128xf32>
    %142 = vector.shape_cast %141 : vector<1x8x128xf32> to vector<8x128xf32>
    %c0_38 = arith.constant 0 : index
    %c0_39 = arith.constant 0 : index
    %143 = vector.load %arg1[%c0_38, %c0_39] : memref<32x128xf32, #tpu.memory_space<vmem>>, vector<32x128xf32>
    %cst_40 = arith.constant dense<0.000000e+00> : vector<8x128xf32>
    %144 = tpu.matmul %139, %143, %cst_40 {dimension_numbers = #tpu.dot_dimension_numbers<[1], [0], [0], [1], [0, 0, 1, 1], [], []>} : vector<8x32xf32>, vector<32x128xf32>, vector<8x128xf32> -> vector<8x128xf32>
    %145 = arith.addf %142, %144 : vector<8x128xf32>
    %146 = math.tanh %145 : vector<8x128xf32>
    %147 = arith.negf %145 : vector<8x128xf32>
    %148 = math.exp %147 : vector<8x128xf32>
    %cst_41 = arith.constant 1.000000e+00 : f32
    %149 = vector.broadcast %cst_41 : f32 to vector<8x128xf32>
    %150 = arith.addf %149, %148 : vector<8x128xf32>
    %151 = arith.divf %149, %150 : vector<8x128xf32>
    %152 = arith.select %5, %146, %151 : vector<8x128xi1>, vector<8x128xf32>
    %153 = vector.extract_strided_slice %152 {offsets = [0, 0], sizes = [8, 32], strides = [1, 1]} : vector<8x128xf32> to vector<8x32xf32>
    %154 = vector.extract_strided_slice %152 {offsets = [0, 32], sizes = [8, 32], strides = [1, 1]} : vector<8x128xf32> to vector<8x32xf32>
    %155 = vector.extract_strided_slice %152 {offsets = [0, 64], sizes = [8, 32], strides = [1, 1]} : vector<8x128xf32> to vector<8x32xf32>
    %156 = vector.extract_strided_slice %152 {offsets = [0, 96], sizes = [8, 32], strides = [1, 1]} : vector<8x128xf32> to vector<8x32xf32>
    %157 = arith.mulf %154, %137 : vector<8x32xf32>
    %158 = arith.mulf %153, %155 : vector<8x32xf32>
    %159 = arith.addf %157, %158 : vector<8x32xf32>
    %160 = math.tanh %159 : vector<8x32xf32>
    %161 = arith.mulf %156, %160 : vector<8x32xf32>
    %c7_i32 = arith.constant 7 : i32
    %162 = arith.index_cast %c7_i32 : i32 to index
    %c0_42 = arith.constant 0 : index
    %c0_43 = arith.constant 0 : index
    %163 = vector.load %arg0[%162, %c0_42, %c0_43] : memref<8x8x128xf32, #tpu.memory_space<vmem>>, vector<1x8x128xf32>
    %164 = vector.shape_cast %163 : vector<1x8x128xf32> to vector<8x128xf32>
    %c0_44 = arith.constant 0 : index
    %c0_45 = arith.constant 0 : index
    %165 = vector.load %arg1[%c0_44, %c0_45] : memref<32x128xf32, #tpu.memory_space<vmem>>, vector<32x128xf32>
    %cst_46 = arith.constant dense<0.000000e+00> : vector<8x128xf32>
    %166 = tpu.matmul %161, %165, %cst_46 {dimension_numbers = #tpu.dot_dimension_numbers<[1], [0], [0], [1], [0, 0, 1, 1], [], []>} : vector<8x32xf32>, vector<32x128xf32>, vector<8x128xf32> -> vector<8x128xf32>
    %167 = arith.addf %164, %166 : vector<8x128xf32>
    %168 = math.tanh %167 : vector<8x128xf32>
    %169 = arith.negf %167 : vector<8x128xf32>
    %170 = math.exp %169 : vector<8x128xf32>
    %cst_47 = arith.constant 1.000000e+00 : f32
    %171 = vector.broadcast %cst_47 : f32 to vector<8x128xf32>
    %172 = arith.addf %171, %170 : vector<8x128xf32>
    %173 = arith.divf %171, %172 : vector<8x128xf32>
    %174 = arith.select %5, %168, %173 : vector<8x128xi1>, vector<8x128xf32>
    %175 = vector.extract_strided_slice %174 {offsets = [0, 0], sizes = [8, 32], strides = [1, 1]} : vector<8x128xf32> to vector<8x32xf32>
    %176 = vector.extract_strided_slice %174 {offsets = [0, 32], sizes = [8, 32], strides = [1, 1]} : vector<8x128xf32> to vector<8x32xf32>
    %177 = vector.extract_strided_slice %174 {offsets = [0, 64], sizes = [8, 32], strides = [1, 1]} : vector<8x128xf32> to vector<8x32xf32>
    %178 = vector.extract_strided_slice %174 {offsets = [0, 96], sizes = [8, 32], strides = [1, 1]} : vector<8x128xf32> to vector<8x32xf32>
    %179 = arith.mulf %176, %159 : vector<8x32xf32>
    %180 = arith.mulf %175, %177 : vector<8x32xf32>
    %181 = arith.addf %179, %180 : vector<8x32xf32>
    %182 = math.tanh %181 : vector<8x32xf32>
    %183 = arith.mulf %178, %182 : vector<8x32xf32>
    %c8_i32 = arith.constant 8 : i32
    %c0_48 = arith.constant 0 : index
    %c0_49 = arith.constant 0 : index
    %184 = vector.load %arg2[%c0_48, %c0_49] : memref<8x128xf32, #tpu.memory_space<vmem>>, vector<8x128xf32>
    %185 = math.tanh %184 : vector<8x128xf32>
    %186 = arith.negf %184 : vector<8x128xf32>
    %187 = math.exp %186 : vector<8x128xf32>
    %cst_50 = arith.constant 1.000000e+00 : f32
    %188 = vector.broadcast %cst_50 : f32 to vector<8x128xf32>
    %189 = arith.addf %188, %187 : vector<8x128xf32>
    %190 = arith.divf %188, %189 : vector<8x128xf32>
    %191 = arith.select %5, %185, %190 : vector<8x128xi1>, vector<8x128xf32>
    %192 = vector.extract_strided_slice %191 {offsets = [0, 0], sizes = [8, 32], strides = [1, 1]} : vector<8x128xf32> to vector<8x32xf32>
    %193 = vector.extract_strided_slice %191 {offsets = [0, 64], sizes = [8, 32], strides = [1, 1]} : vector<8x128xf32> to vector<8x32xf32>
    %194 = vector.extract_strided_slice %191 {offsets = [0, 96], sizes = [8, 32], strides = [1, 1]} : vector<8x128xf32> to vector<8x32xf32>
    %195 = arith.mulf %192, %193 : vector<8x32xf32>
    %196 = math.tanh %195 : vector<8x32xf32>
    %197 = arith.mulf %194, %196 : vector<8x32xf32>
    %198 = tpu.concatenate %183, %197 in 1 : vector<8x32xf32>, vector<8x32xf32> -> vector<8x64xf32>
    %c0_51 = arith.constant 0 : index
    %c0_52 = arith.constant 0 : index
    %199 = vector.load %arg3[%c0_51, %c0_52] : memref<64x30xf32, #tpu.memory_space<vmem>>, vector<64x30xf32>
    %cst_53 = arith.constant dense<0.000000e+00> : vector<8x30xf32>
    %200 = tpu.matmul %198, %199, %cst_53 {dimension_numbers = #tpu.dot_dimension_numbers<[1], [0], [0], [1], [0, 0, 1, 1], [], []>} : vector<8x64xf32>, vector<64x30xf32>, vector<8x30xf32> -> vector<8x30xf32>
    %c0_54 = arith.constant 0 : index
    %c0_55 = arith.constant 0 : index
    %201 = vector.load %arg4[%c0_54, %c0_55] : memref<1x30xf32, #tpu.memory_space<vmem>>, vector<1x30xf32>
    %202 = vector.broadcast %201 : vector<1x30xf32> to vector<8x30xf32>
    %203 = arith.addf %200, %202 : vector<8x30xf32>
    %cst_56 = arith.constant 0.000000e+00 : f32
    %204 = vector.broadcast %cst_56 : f32 to vector<8x30xf32>
    %205 = arith.maximumf %203, %204 : vector<8x30xf32>
    %c0_57 = arith.constant 0 : index
    %c0_58 = arith.constant 0 : index
    %206 = vector.load %arg5[%c0_57, %c0_58] : memref<30x8xf32, #tpu.memory_space<vmem>>, vector<30x8xf32>
    %cst_59 = arith.constant dense<0.000000e+00> : vector<8x8xf32>
    %207 = tpu.matmul %205, %206, %cst_59 {dimension_numbers = #tpu.dot_dimension_numbers<[1], [0], [0], [1], [0, 0, 1, 1], [], []>} : vector<8x30xf32>, vector<30x8xf32>, vector<8x8xf32> -> vector<8x8xf32>
    %c0_60 = arith.constant 0 : index
    %c0_61 = arith.constant 0 : index
    %208 = vector.load %arg6[%c0_60, %c0_61] : memref<1x8xf32, #tpu.memory_space<vmem>>, vector<1x8xf32>
    %209 = vector.broadcast %208 : vector<1x8xf32> to vector<8x8xf32>
    %210 = arith.addf %207, %209 : vector<8x8xf32>
    %c0_62 = arith.constant 0 : index
    %c0_63 = arith.constant 0 : index
    %211 = vector.load %arg7[%c0_62, %c0_63] : memref<8x8xf32, #tpu.memory_space<vmem>>, vector<8x8xf32>
    tpu.vector_store %arg7[%c0_62, %c0_63], %210 {strides = array<i32>} : memref<8x8xf32, #tpu.memory_space<vmem>>, vector<8x8xf32>,
    return
  }
}

</mosaic_0001>

<llo_original>
// kernel: tpu_custom_call.1
$region0: #{tpu_custom_call.1}
  #allocation0 [shape = 'u32[]', space=smem, size = 0x4, offset = 0x4, fixed_abs, tag = 'smem constant byte address 0x4 - core index']
  #allocation1 [shape = 'u32[144,128]{1,0:T(1,128)}', space=vmem, size = 0x12000, scoped, tag = 'internal scratch']
  %s0 = inlined_call_operand.vmem [shape: f32[8,8,128], index: 0, kind: input, shape index: {}]
  %s1 = inlined_call_operand.vmem [shape: f32[32,128], index: 1, kind: input, shape index: {}]
  %s2 = inlined_call_operand.vmem [shape: f32[8,128], index: 2, kind: input, shape index: {}]
  %s3 = inlined_call_operand.vmem [shape: f32[64,30], index: 3, kind: input, shape index: {}]
  %s4 = inlined_call_operand.vmem [shape: f32[1,30], index: 4, kind: input, shape index: {}]
  %s5 = inlined_call_operand.vmem [shape: f32[30,8], index: 5, kind: input, shape index: {}]
  %s6 = inlined_call_operand.vmem [shape: f32[1,8], index: 6, kind: input, shape index: {}]
  %s7 = inlined_call_operand.hbm [shape: f32[8,8], index: 7, kind: output, shape index: {}]
  %s8 = sld [smem:[#allocation0]]
  $region38: #{tpu_custom_call.1} parent=0
    _
  %s10 = ssub.s32 1, %s8
  %s11 = scalar_select 0, %s10, %s8
  $region1: #{tpu_custom_call.1} parent=0
    #allocation2 [shape = 'u8[4096]{0}', space=vmem, size = 0x1000, scoped, tag = 'output window, operand 0, single buffered']
    #allocation3 [shape = 's32[1]{0}', space=sflag, size = 0x4, scoped, tag = 'scoped memory for tpu_custom_call.1']
    %12 = vsyncpa [#allocation3], 0
    // Predicated region
    $region2: #{tpu_custom_call.1} parent=1 // pred_check
      _
    $region3: #{tpu_custom_call.1} parent=1 // pred_check_branch
      %14 = sbr.rel (0) target = $region5
    $region4: #{tpu_custom_call.1} parent=1 // pred_region
      _
    $region5: #{tpu_custom_call.1} parent=1 // pred_fallthru
      _
    // Predicated region
    $region6: #{tpu_custom_call.1} parent=1 // pred_check
      _
    $region7: #{tpu_custom_call.1} parent=1 // pred_check_branch
      %16 = sbr.rel (0) target = $region9
    $region8: #{tpu_custom_call.1} parent=1 // pred_region
      _
    $region9: #{tpu_custom_call.1} parent=1 // pred_fallthru
      _
    // Predicated region
    $region10: #{tpu_custom_call.1} parent=1 // pred_check
      _
    $region11: #{tpu_custom_call.1} parent=1 // pred_check_branch
      %18 = sbr.rel (0) target = $region13
    $region12: #{tpu_custom_call.1} parent=1 // pred_region
      _
    $region13: #{tpu_custom_call.1} parent=1 // pred_fallthru
      _
    // Predicated region
    $region14: #{tpu_custom_call.1} parent=1 // pred_check
      _
    $region15: #{tpu_custom_call.1} parent=1 // pred_check_branch
      %20 = sbr.rel (0) target = $region17
    $region16: #{tpu_custom_call.1} parent=1 // pred_region
      _
    $region17: #{tpu_custom_call.1} parent=1 // pred_fallthru
      _
    // Predicated region
    $region18: #{tpu_custom_call.1} parent=1 // pred_check
      _
    $region19: #{tpu_custom_call.1} parent=1 // pred_check_branch
      %22 = sbr.rel (0) target = $region21
    $region20: #{tpu_custom_call.1} parent=1 // pred_region
      _
    $region21: #{tpu_custom_call.1} parent=1 // pred_fallthru
      _
    // Predicated region
    $region22: #{tpu_custom_call.1} parent=1 // pred_check
      _
    $region23: #{tpu_custom_call.1} parent=1 // pred_check_branch
      %24 = sbr.rel (0) target = $region25
    $region24: #{tpu_custom_call.1} parent=1 // pred_region
      _
    $region25: #{tpu_custom_call.1} parent=1 // pred_fallthru
      _
    // Predicated region
    $region26: #{tpu_custom_call.1} parent=1 // pred_check
      _
    $region27: #{tpu_custom_call.1} parent=1 // pred_check_branch
      %26 = sbr.rel (0) target = $region29
    $region28: #{tpu_custom_call.1} parent=1 // pred_region
      _
    $region29: #{tpu_custom_call.1} parent=1 // pred_fallthru
      _
    %v27 = vlaneseq
    %v28 = vand.u32 %v27, 127
    %vm29 = vcmp.ge.s32.totalorder %v28, 64
    %vm30 = vcmp.lt.s32.totalorder %v28, 96
    %vm31 = vmand %vm29, %vm30
    %v32 = vld [vmem:[%s0] sm:$0xff]
    %v33 = vld [vmem:[%s1] sm:$0xff]
    %v34 = vld [vmem:[%s1 + $0x8] sm:$0xff]
    %v35 = vld [vmem:[%s1 + $0x10] sm:$0xff]
    %v36 = vld [vmem:[%s1 + $0x18] sm:$0xff]
    %vm37 = vcmask 261120
    %v39 = vsel %vm37, 0.0, 0
    %41 = vmatprep.subr.mxu0 0.0
    %42 = vmatpush1.msra.mxu0 %v33
    %43 = vmatprep.subr.mxu0 0.0
    %44 = vmatpush1.msra.mxu0 %v34
    %45 = vmatprep.subr.mxu0 0.0
    %46 = vmatpush1.msra.mxu0 %v35
    %47 = vmatprep.subr.mxu0 0.0
    %48 = vmatpush1.msra.mxu0 %v36
    %49 = vmatprep.subr.mxu0 0.0
    %50 = vmatpush1.msra.mxu0 0.0
    %51 = vmatprep.subr.mxu0 0.0
    %52 = vmatpush1.msra.mxu0 0.0
    %53 = vmatprep.subr.mxu0 0.0
    %54 = vmatpush1.msra.mxu0 0.0
    %55 = vmatprep.subr.mxu0 0.0
    %56 = vmatpush1.msra.mxu0 0.0
    %57 = vmatprep.subr.mxu0 0.0
    %58 = vmatpush1.msra.mxu0 0.0
    %59 = vmatprep.subr.mxu0 0.0
    %60 = vmatpush1.msra.mxu0 0.0
    %61 = vmatprep.subr.mxu0 0.0
    %62 = vmatpush1.msra.mxu0 0.0
    %63 = vmatprep.subr.mxu0 0.0
    %64 = vmatpush1.msra.mxu0 0.0
    %65 = vmatprep.subr.mxu0 0.0
    %66 = vmatpush1.msra.mxu0 0.0
    %67 = vmatprep.subr.mxu0 0.0
    %68 = vmatpush1.msra.mxu0 0.0
    %69 = vmatprep.subr.mxu0 0.0
    %70 = vmatpush1.msra.mxu0 0.0
    %71 = vmatprep.subr.mxu0 0.0
    %72 = vmatpush1.msra.mxu0 0.0
    %73 = vmatprep.subr.mxu0 0.0
    %74 = vmatpush1.msra.mxu0 0.0
    %75 = vmatprep.subr.mxu0 0.0
    %76 = vmatpush1.msra.mxu0 0.0
    %77 = vmatprep.subr.mxu0 0.0
    %78 = vmatpush1.msra.mxu0 0.0
    %79 = vmatprep.subr.mxu0 0.0
    %80 = vmatpush1.msra.mxu0 0.0
    %81 = vmatprep.subr.mxu0 0.0
    %82 = vmatpush1.msra.mxu0 0.0
    %83 = vmatprep.subr.mxu0 0.0
    %84 = vmatpush1.msra.mxu0 0.0
    %85 = vmatprep.subr.mxu0 0.0
    %86 = vmatpush1.msra.mxu0 0.0
    %87 = vmatprep.subr.mxu0 0.0
    %88 = vmatpush1.msra.mxu0 0.0
    %89 = vmatprep.subr.mxu0 0.0
    %90 = vmatpush1.msra.mxu0 0.0
    %91 = vmatprep.subr.mxu0 0.0
    %92 = vmatpush1.msra.mxu0 0.0
    %93 = vmatprep.subr.mxu0 0.0
    %94 = vmatpush1.msra.mxu0 0.0
    %95 = vmatprep.subr.mxu0 0.0
    %96 = vmatpush1.msra.mxu0 0.0
    %97 = vmatprep.subr.mxu0 0.0
    %98 = vmatpush1.msra.mxu0 0.0
    %99 = vmatprep.subr.mxu0 0.0
    %100 = vmatpush1.msra.mxu0 0.0
    %101 = vmatprep.subr.mxu0 0.0
    %102 = vmatpush1.msra.mxu0 0.0
    %103 = vmatprep.subr.mxu0 0.0
    %104 = vmatpush1.msra.mxu0 0.0
    %105 = vmatprep.mubr.f32.mxu0 0.0
    %106 = vmatmul.mubr.f32.gmra.mrb[0].mxu0 %v39
    %v107 = vpop.f32.mrb[0].mxu0
    %v108 = vadd.f32 0.0, %v107
    %v109 = vpop.f32.mrb[0].mxu0
    %110 = vdwg.mxu0
    %v111 = vadd.f32 %v32, %v108
    %v112 = vtanh.pop %v111
    %v113 = vxor.u32 %v111, 2147483648
    %v114 = vmul.f32 %v113, 1.442695
    %v115 = vpow.pop %v114
    %v116 = vadd.f32 %v115, 1.0
    %v117 = vrcp.pop %v116
    %v118 = vmul.f32 1.0, %v117
    %v119 = vsel %vm31, %v112, %v118
    %v120 = vmul.f32 %v119, 0.0
    %122 = vrot.lane.b32.xlu0 %v119, 64
    %v123 = vpop.permute.xlu0 %122
    %v125 = vmul.f32 %v119, %v123
    %127 = vrot.lane.b32.xlu0 %v125, 32
    %v128 = vpop.permute.xlu0 %127
    %v130 = vadd.f32 %v120, %v128
    %v131 = vtanh.pop %v130
    %133 = vrot.lane.b32.xlu0 %v131, 64
    %v134 = vpop.permute.xlu0 %133
    %v136 = vmul.f32 %v119, %v134
    %s137 = scalar_lea.vmem %s0, 8
    %v138 = vld [vmem:[%s137] sm:$0xff]
    %140 = vrot.lane.b32.xlu0 %v136, 32
    %v141 = vpop.permute.xlu0 %140
    %v142 = vsel %vm37, %v141, 0
    %144 = vmatprep.subr.mxu0 0.0
    %145 = vmatpush1.msra.mxu0 %v33
    %146 = vmatprep.subr.mxu0 0.0
    %147 = vmatpush1.msra.mxu0 %v34
    %148 = vmatprep.subr.mxu0 0.0
    %149 = vmatpush1.msra.mxu0 %v35
    %150 = vmatprep.subr.mxu0 0.0
    %151 = vmatpush1.msra.mxu0 %v36
    %152 = vmatprep.subr.mxu0 0.0
    %153 = vmatpush1.msra.mxu0 0.0
    %154 = vmatprep.subr.mxu0 0.0
    %155 = vmatpush1.msra.mxu0 0.0
    %156 = vmatprep.subr.mxu0 0.0
    %157 = vmatpush1.msra.mxu0 0.0
    %158 = vmatprep.subr.mxu0 0.0
    %159 = vmatpush1.msra.mxu0 0.0
    %160 = vmatprep.subr.mxu0 0.0
    %161 = vmatpush1.msra.mxu0 0.0
    %162 = vmatprep.subr.mxu0 0.0
    %163 = vmatpush1.msra.mxu0 0.0
    %164 = vmatprep.subr.mxu0 0.0
    %165 = vmatpush1.msra.mxu0 0.0
    %166 = vmatprep.subr.mxu0 0.0
    %167 = vmatpush1.msra.mxu0 0.0
    %168 = vmatprep.subr.mxu0 0.0
    %169 = vmatpush1.msra.mxu0 0.0
    %170 = vmatprep.subr.mxu0 0.0
    %171 = vmatpush1.msra.mxu0 0.0
    %172 = vmatprep.subr.mxu0 0.0
    %173 = vmatpush1.msra.mxu0 0.0
    %174 = vmatprep.subr.mxu0 0.0
    %175 = vmatpush1.msra.mxu0 0.0
    %176 = vmatprep.subr.mxu0 0.0
    %177 = vmatpush1.msra.mxu0 0.0
    %178 = vmatprep.subr.mxu0 0.0
    %179 = vmatpush1.msra.mxu0 0.0
    %180 = vmatprep.subr.mxu0 0.0
    %181 = vmatpush1.msra.mxu0 0.0
    %182 = vmatprep.subr.mxu0 0.0
    %183 = vmatpush1.msra.mxu0 0.0
    %184 = vmatprep.subr.mxu0 0.0
    %185 = vmatpush1.msra.mxu0 0.0
    %186 = vmatprep.subr.mxu0 0.0
    %187 = vmatpush1.msra.mxu0 0.0
    %188 = vmatprep.subr.mxu0 0.0
    %189 = vmatpush1.msra.mxu0 0.0
    %190 = vmatprep.subr.mxu0 0.0
    %191 = vmatpush1.msra.mxu0 0.0
    %192 = vmatprep.subr.mxu0 0.0
    %193 = vmatpush1.msra.mxu0 0.0
    %194 = vmatprep.subr.mxu0 0.0
    %195 = vmatpush1.msra.mxu0 0.0
    %196 = vmatprep.subr.mxu0 0.0
    %197 = vmatpush1.msra.mxu0 0.0
    %198 = vmatprep.subr.mxu0 0.0
    %199 = vmatpush1.msra.mxu0 0.0
    %200 = vmatprep.subr.mxu0 0.0
    %201 = vmatpush1.msra.mxu0 0.0
    %202 = vmatprep.subr.mxu0 0.0
    %203 = vmatpush1.msra.mxu0 0.0
    %204 = vmatprep.subr.mxu0 0.0
    %205 = vmatpush1.msra.mxu0 0.0
    %206 = vmatprep.subr.mxu0 0.0
    %207 = vmatpush1.msra.mxu0 0.0
    %208 = vmatprep.mubr.f32.mxu0 0.0
    %209 = vmatmul.mubr.f32.gmra.mrb[0].mxu0 %v142
    %v210 = vpop.f32.mrb[0].mxu0
    %v211 = vadd.f32 0.0, %v210
    %v212 = vpop.f32.mrb[0].mxu0
    %213 = vdwg.mxu0
    %v214 = vadd.f32 %v138, %v211
    %v215 = vtanh.pop %v214
    %v216 = vxor.u32 %v214, 2147483648
    %v217 = vmul.f32 %v216, 1.442695
    %v218 = vpow.pop %v217
    %v219 = vadd.f32 %v218, 1.0
    %v220 = vrcp.pop %v219
    %v221 = vmul.f32 1.0, %v220
    %v222 = vsel %vm31, %v215, %v221
    %v223 = vmul.f32 %v222, %v130
    %225 = vrot.lane.b32.xlu0 %v222, 64
    %v226 = vpop.permute.xlu0 %225
    %v228 = vmul.f32 %v222, %v226
    %230 = vrot.lane.b32.xlu0 %v228, 32
    %v231 = vpop.permute.xlu0 %230
    %v233 = vadd.f32 %v223, %v231
    %v234 = vtanh.pop %v233
    %236 = vrot.lane.b32.xlu0 %v234, 64
    %v237 = vpop.permute.xlu0 %236
    %v239 = vmul.f32 %v222, %v237
    %s240 = scalar_lea.vmem %s0, 16
    %v241 = vld [vmem:[%s240] sm:$0xff]
    %243 = vrot.lane.b32.xlu0 %v239, 32
    %v244 = vpop.permute.xlu0 %243
    %v245 = vsel %vm37, %v244, 0
    %247 = vmatprep.subr.mxu0 0.0
    %248 = vmatpush1.msra.mxu0 %v33
    %249 = vmatprep.subr.mxu0 0.0
    %250 = vmatpush1.msra.mxu0 %v34
    %251 = vmatprep.subr.mxu0 0.0
    %252 = vmatpush1.msra.mxu0 %v35
    %253 = vmatprep.subr.mxu0 0.0
    %254 = vmatpush1.msra.mxu0 %v36
    %255 = vmatprep.subr.mxu0 0.0
    %256 = vmatpush1.msra.mxu0 0.0
    %257 = vmatprep.subr.mxu0 0.0
    %258 = vmatpush1.msra.mxu0 0.0
    %259 = vmatprep.subr.mxu0 0.0
    %260 = vmatpush1.msra.mxu0 0.0
    %261 = vmatprep.subr.mxu0 0.0
    %262 = vmatpush1.msra.mxu0 0.0
    %263 = vmatprep.subr.mxu0 0.0
    %264 = vmatpush1.msra.mxu0 0.0
    %265 = vmatprep.subr.mxu0 0.0
    %266 = vmatpush1.msra.mxu0 0.0
    %267 = vmatprep.subr.mxu0 0.0
    %268 = vmatpush1.msra.mxu0 0.0
    %269 = vmatprep.subr.mxu0 0.0
    %270 = vmatpush1.msra.mxu0 0.0
    %271 = vmatprep.subr.mxu0 0.0
    %272 = vmatpush1.msra.mxu0 0.0
    %273 = vmatprep.subr.mxu0 0.0
    %274 = vmatpush1.msra.mxu0 0.0
    %275 = vmatprep.subr.mxu0 0.0
    %276 = vmatpush1.msra.mxu0 0.0
    %277 = vmatprep.subr.mxu0 0.0
    %278 = vmatpush1.msra.mxu0 0.0
    %279 = vmatprep.subr.mxu0 0.0
    %280 = vmatpush1.msra.mxu0 0.0
    %281 = vmatprep.subr.mxu0 0.0
    %282 = vmatpush1.msra.mxu0 0.0
    %283 = vmatprep.subr.mxu0 0.0
    %284 = vmatpush1.msra.mxu0 0.0
    %285 = vmatprep.subr.mxu0 0.0
    %286 = vmatpush1.msra.mxu0 0.0
    %287 = vmatprep.subr.mxu0 0.0
    %288 = vmatpush1.msra.mxu0 0.0
    %289 = vmatprep.subr.mxu0 0.0
    %290 = vmatpush1.msra.mxu0 0.0
    %291 = vmatprep.subr.mxu0 0.0
    %292 = vmatpush1.msra.mxu0 0.0
    %293 = vmatprep.subr.mxu0 0.0
    %294 = vmatpush1.msra.mxu0 0.0
    %295 = vmatprep.subr.mxu0 0.0
    %296 = vmatpush1.msra.mxu0 0.0
    %297 = vmatprep.subr.mxu0 0.0
    %298 = vmatpush1.msra.mxu0 0.0
    %299 = vmatprep.subr.mxu0 0.0
    %300 = vmatpush1.msra.mxu0 0.0
    %301 = vmatprep.subr.mxu0 0.0
    %302 = vmatpush1.msra.mxu0 0.0
    %303 = vmatprep.subr.mxu0 0.0
    %304 = vmatpush1.msra.mxu0 0.0
    %305 = vmatprep.subr.mxu0 0.0
    %306 = vmatpush1.msra.mxu0 0.0
    %307 = vmatprep.subr.mxu0 0.0
    %308 = vmatpush1.msra.mxu0 0.0
    %309 = vmatprep.subr.mxu0 0.0
    %310 = vmatpush1.msra.mxu0 0.0
    %311 = vmatprep.mubr.f32.mxu0 0.0
    %312 = vmatmul.mubr.f32.gmra.mrb[0].mxu0 %v245
    %v313 = vpop.f32.mrb[0].mxu0
    %v314 = vadd.f32 0.0, %v313
    %v315 = vpop.f32.mrb[0].mxu0
    %316 = vdwg.mxu0
    %v317 = vadd.f32 %v241, %v314
    %v318 = vtanh.pop %v317
    %v319 = vxor.u32 %v317, 2147483648
    %v320 = vmul.f32 %v319, 1.442695
    %v321 = vpow.pop %v320
    %v322 = vadd.f32 %v321, 1.0
    %v323 = vrcp.pop %v322
    %v324 = vmul.f32 1.0, %v323
    %v325 = vsel %vm31, %v318, %v324
    %v326 = vmul.f32 %v325, %v233
    %328 = vrot.lane.b32.xlu0 %v325, 64
    %v329 = vpop.permute.xlu0 %328
    %v331 = vmul.f32 %v325, %v329
    %333 = vrot.lane.b32.xlu0 %v331, 32
    %v334 = vpop.permute.xlu0 %333
    %v336 = vadd.f32 %v326, %v334
    %v337 = vtanh.pop %v336
    %339 = vrot.lane.b32.xlu0 %v337, 64
    %v340 = vpop.permute.xlu0 %339
    %v342 = vmul.f32 %v325, %v340
    %s343 = scalar_lea.vmem %s0, 24
    %v344 = vld [vmem:[%s343] sm:$0xff]
    %346 = vrot.lane.b32.xlu0 %v342, 32
    %v347 = vpop.permute.xlu0 %346
    %v348 = vsel %vm37, %v347, 0
    %350 = vmatprep.subr.mxu0 0.0
    %351 = vmatpush1.msra.mxu0 %v33
    %352 = vmatprep.subr.mxu0 0.0
    %353 = vmatpush1.msra.mxu0 %v34
    %354 = vmatprep.subr.mxu0 0.0
    %355 = vmatpush1.msra.mxu0 %v35
    %356 = vmatprep.subr.mxu0 0.0
    %357 = vmatpush1.msra.mxu0 %v36
    %358 = vmatprep.subr.mxu0 0.0
    %359 = vmatpush1.msra.mxu0 0.0
    %360 = vmatprep.subr.mxu0 0.0
    %361 = vmatpush1.msra.mxu0 0.0
    %362 = vmatprep.subr.mxu0 0.0
    %363 = vmatpush1.msra.mxu0 0.0
    %364 = vmatprep.subr.mxu0 0.0
    %365 = vmatpush1.msra.mxu0 0.0
    %366 = vmatprep.subr.mxu0 0.0
    %367 = vmatpush1.msra.mxu0 0.0
    %368 = vmatprep.subr.mxu0 0.0
    %369 = vmatpush1.msra.mxu0 0.0
    %370 = vmatprep.subr.mxu0 0.0
    %371 = vmatpush1.msra.mxu0 0.0
    %372 = vmatprep.subr.mxu0 0.0
    %373 = vmatpush1.msra.mxu0 0.0
    %374 = vmatprep.subr.mxu0 0.0
    %375 = vmatpush1.msra.mxu0 0.0
    %376 = vmatprep.subr.mxu0 0.0
    %377 = vmatpush1.msra.mxu0 0.0
    %378 = vmatprep.subr.mxu0 0.0
    %379 = vmatpush1.msra.mxu0 0.0
    %380 = vmatprep.subr.mxu0 0.0
    %381 = vmatpush1.msra.mxu0 0.0
    %382 = vmatprep.subr.mxu0 0.0
    %383 = vmatpush1.msra.mxu0 0.0
    %384 = vmatprep.subr.mxu0 0.0
    %385 = vmatpush1.msra.mxu0 0.0
    %386 = vmatprep.subr.mxu0 0.0
    %387 = vmatpush1.msra.mxu0 0.0
    %388 = vmatprep.subr.mxu0 0.0
    %389 = vmatpush1.msra.mxu0 0.0
    %390 = vmatprep.subr.mxu0 0.0
    %391 = vmatpush1.msra.mxu0 0.0
    %392 = vmatprep.subr.mxu0 0.0
    %393 = vmatpush1.msra.mxu0 0.0
    %394 = vmatprep.subr.mxu0 0.0
    %395 = vmatpush1.msra.mxu0 0.0
    %396 = vmatprep.subr.mxu0 0.0
    %397 = vmatpush1.msra.mxu0 0.0
    %398 = vmatprep.subr.mxu0 0.0
    %399 = vmatpush1.msra.mxu0 0.0
    %400 = vmatprep.subr.mxu0 0.0
    %401 = vmatpush1.msra.mxu0 0.0
    %402 = vmatprep.subr.mxu0 0.0
    %403 = vmatpush1.msra.mxu0 0.0
    %404 = vmatprep.subr.mxu0 0.0
    %405 = vmatpush1.msra.mxu0 0.0
    %406 = vmatprep.subr.mxu0 0.0
    %407 = vmatpush1.msra.mxu0 0.0
    %408 = vmatprep.subr.mxu0 0.0
    %409 = vmatpush1.msra.mxu0 0.0
    %410 = vmatprep.subr.mxu0 0.0
    %411 = vmatpush1.msra.mxu0 0.0
    %412 = vmatprep.subr.mxu0 0.0
    %413 = vmatpush1.msra.mxu0 0.0
    %414 = vmatprep.mubr.f32.mxu0 0.0
    %415 = vmatmul.mubr.f32.gmra.mrb[0].mxu0 %v348
    %v416 = vpop.f32.mrb[0].mxu0
    %v417 = vadd.f32 0.0, %v416
    %v418 = vpop.f32.mrb[0].mxu0
    %419 = vdwg.mxu0
    %v420 = vadd.f32 %v344, %v417
    %v421 = vtanh.pop %v420
    %v422 = vxor.u32 %v420, 2147483648
    %v423 = vmul.f32 %v422, 1.442695
    %v424 = vpow.pop %v423
    %v425 = vadd.f32 %v424, 1.0
    %v426 = vrcp.pop %v425
    %v427 = vmul.f32 1.0, %v426
    %v428 = vsel %vm31, %v421, %v427
    %v429 = vmul.f32 %v428, %v336
    %431 = vrot.lane.b32.xlu0 %v428, 64
    %v432 = vpop.permute.xlu0 %431
    %v434 = vmul.f32 %v428, %v432
    %436 = vrot.lane.b32.xlu0 %v434, 32
    %v437 = vpop.permute.xlu0 %436
    %v439 = vadd.f32 %v429, %v437
    %v440 = vtanh.pop %v439
    %442 = vrot.lane.b32.xlu0 %v440, 64
    %v443 = vpop.permute.xlu0 %442
    %v445 = vmul.f32 %v428, %v443
    %s446 = scalar_lea.vmem %s0, 32
    %v447 = vld [vmem:[%s446] sm:$0xff]
    %449 = vrot.lane.b32.xlu0 %v445, 32
    %v450 = vpop.permute.xlu0 %449
    %v451 = vsel %vm37, %v450, 0
    %453 = vmatprep.subr.mxu0 0.0
    %454 = vmatpush1.msra.mxu0 %v33
    %455 = vmatprep.subr.mxu0 0.0
    %456 = vmatpush1.msra.mxu0 %v34
    %457 = vmatprep.subr.mxu0 0.0
    %458 = vmatpush1.msra.mxu0 %v35
    %459 = vmatprep.subr.mxu0 0.0
    %460 = vmatpush1.msra.mxu0 %v36
    %461 = vmatprep.subr.mxu0 0.0
    %462 = vmatpush1.msra.mxu0 0.0
    %463 = vmatprep.subr.mxu0 0.0
    %464 = vmatpush1.msra.mxu0 0.0
    %465 = vmatprep.subr.mxu0 0.0
    %466 = vmatpush1.msra.mxu0 0.0
    %467 = vmatprep.subr.mxu0 0.0
    %468 = vmatpush1.msra.mxu0 0.0
    %469 = vmatprep.subr.mxu0 0.0
    %470 = vmatpush1.msra.mxu0 0.0
    %471 = vmatprep.subr.mxu0 0.0
    %472 = vmatpush1.msra.mxu0 0.0
    %473 = vmatprep.subr.mxu0 0.0
    %474 = vmatpush1.msra.mxu0 0.0
    %475 = vmatprep.subr.mxu0 0.0
    %476 = vmatpush1.msra.mxu0 0.0
    %477 = vmatprep.subr.mxu0 0.0
    %478 = vmatpush1.msra.mxu0 0.0
    %479 = vmatprep.subr.mxu0 0.0
    %480 = vmatpush1.msra.mxu0 0.0
    %481 = vmatprep.subr.mxu0 0.0
    %482 = vmatpush1.msra.mxu0 0.0
    %483 = vmatprep.subr.mxu0 0.0
    %484 = vmatpush1.msra.mxu0 0.0
    %485 = vmatprep.subr.mxu0 0.0
    %486 = vmatpush1.msra.mxu0 0.0
    %487 = vmatprep.subr.mxu0 0.0
    %488 = vmatpush1.msra.mxu0 0.0
    %489 = vmatprep.subr.mxu0 0.0
    %490 = vmatpush1.msra.mxu0 0.0
    %491 = vmatprep.subr.mxu0 0.0
    %492 = vmatpush1.msra.mxu0 0.0
    %493 = vmatprep.subr.mxu0 0.0
    %494 = vmatpush1.msra.mxu0 0.0
    %495 = vmatprep.subr.mxu0 0.0
    %496 = vmatpush1.msra.mxu0 0.0
    %497 = vmatprep.subr.mxu0 0.0
    %498 = vmatpush1.msra.mxu0 0.0
    %499 = vmatprep.subr.mxu0 0.0
    %500 = vmatpush1.msra.mxu0 0.0
    %501 = vmatprep.subr.mxu0 0.0
    %502 = vmatpush1.msra.mxu0 0.0
    %503 = vmatprep.subr.mxu0 0.0
    %504 = vmatpush1.msra.mxu0 0.0
    %505 = vmatprep.subr.mxu0 0.0
    %506 = vmatpush1.msra.mxu0 0.0
    %507 = vmatprep.subr.mxu0 0.0
    %508 = vmatpush1.msra.mxu0 0.0
    %509 = vmatprep.subr.mxu0 0.0
    %510 = vmatpush1.msra.mxu0 0.0
    %511 = vmatprep.subr.mxu0 0.0
    %512 = vmatpush1.msra.mxu0 0.0
    %513 = vmatprep.subr.mxu0 0.0
    %514 = vmatpush1.msra.mxu0 0.0
    %515 = vmatprep.subr.mxu0 0.0
    %516 = vmatpush1.msra.mxu0 0.0
    %517 = vmatprep.mubr.f32.mxu0 0.0
    %518 = vmatmul.mubr.f32.gmra.mrb[0].mxu0 %v451
    %v519 = vpop.f32.mrb[0].mxu0
    %v520 = vadd.f32 0.0, %v519
    %v521 = vpop.f32.mrb[0].mxu0
    %522 = vdwg.mxu0
    %v523 = vadd.f32 %v447, %v520
    %v524 = vtanh.pop %v523
    %v525 = vxor.u32 %v523, 2147483648
    %v526 = vmul.f32 %v525, 1.442695
    %v527 = vpow.pop %v526
    %v528 = vadd.f32 %v527, 1.0
    %v529 = vrcp.pop %v528
    %v530 = vmul.f32 1.0, %v529
    %v531 = vsel %vm31, %v524, %v530
    %v532 = vmul.f32 %v531, %v439
    %534 = vrot.lane.b32.xlu0 %v531, 64
    %v535 = vpop.permute.xlu0 %534
    %v537 = vmul.f32 %v531, %v535
    %539 = vrot.lane.b32.xlu0 %v537, 32
    %v540 = vpop.permute.xlu0 %539
    %v542 = vadd.f32 %v532, %v540
    %v543 = vtanh.pop %v542
    %545 = vrot.lane.b32.xlu0 %v543, 64
    %v546 = vpop.permute.xlu0 %545
    %v548 = vmul.f32 %v531, %v546
    %s549 = scalar_lea.vmem %s0, 40
    %v550 = vld [vmem:[%s549] sm:$0xff]
    %552 = vrot.lane.b32.xlu0 %v548, 32
    %v553 = vpop.permute.xlu0 %552
    %v554 = vsel %vm37, %v553, 0
    %556 = vmatprep.subr.mxu0 0.0
    %557 = vmatpush1.msra.mxu0 %v33
    %558 = vmatprep.subr.mxu0 0.0
    %559 = vmatpush1.msra.mxu0 %v34
    %560 = vmatprep.subr.mxu0 0.0
    %561 = vmatpush1.msra.mxu0 %v35
    %562 = vmatprep.subr.mxu0 0.0
    %563 = vmatpush1.msra.mxu0 %v36
    %564 = vmatprep.subr.mxu0 0.0
    %565 = vmatpush1.msra.mxu0 0.0
    %566 = vmatprep.subr.mxu0 0.0
    %567 = vmatpush1.msra.mxu0 0.0
    %568 = vmatprep.subr.mxu0 0.0
    %569 = vmatpush1.msra.mxu0 0.0
    %570 = vmatprep.subr.mxu0 0.0
    %571 = vmatpush1.msra.mxu0 0.0
    %572 = vmatprep.subr.mxu0 0.0
    %573 = vmatpush1.msra.mxu0 0.0
    %574 = vmatprep.subr.mxu0 0.0
    %575 = vmatpush1.msra.mxu0 0.0
    %576 = vmatprep.subr.mxu0 0.0
    %577 = vmatpush1.msra.mxu0 0.0
    %578 = vmatprep.subr.mxu0 0.0
    %579 = vmatpush1.msra.mxu0 0.0
    %580 = vmatprep.subr.mxu0 0.0
    %581 = vmatpush1.msra.mxu0 0.0
    %582 = vmatprep.subr.mxu0 0.0
    %583 = vmatpush1.msra.mxu0 0.0
    %584 = vmatprep.subr.mxu0 0.0
    %585 = vmatpush1.msra.mxu0 0.0
    %586 = vmatprep.subr.mxu0 0.0
    %587 = vmatpush1.msra.mxu0 0.0
    %588 = vmatprep.subr.mxu0 0.0
    %589 = vmatpush1.msra.mxu0 0.0
    %590 = vmatprep.subr.mxu0 0.0
    %591 = vmatpush1.msra.mxu0 0.0
    %592 = vmatprep.subr.mxu0 0.0
    %593 = vmatpush1.msra.mxu0 0.0
    %594 = vmatprep.subr.mxu0 0.0
    %595 = vmatpush1.msra.mxu0 0.0
    %596 = vmatprep.subr.mxu0 0.0
    %597 = vmatpush1.msra.mxu0 0.0
    %598 = vmatprep.subr.mxu0 0.0
    %599 = vmatpush1.msra.mxu0 0.0
    %600 = vmatprep.subr.mxu0 0.0
    %601 = vmatpush1.msra.mxu0 0.0
    %602 = vmatprep.subr.mxu0 0.0
    %603 = vmatpush1.msra.mxu0 0.0
    %604 = vmatprep.subr.mxu0 0.0
    %605 = vmatpush1.msra.mxu0 0.0
    %606 = vmatprep.subr.mxu0 0.0
    %607 = vmatpush1.msra.mxu0 0.0
    %608 = vmatprep.subr.mxu0 0.0
    %609 = vmatpush1.msra.mxu0 0.0
    %610 = vmatprep.subr.mxu0 0.0
    %611 = vmatpush1.msra.mxu0 0.0
    %612 = vmatprep.subr.mxu0 0.0
    %613 = vmatpush1.msra.mxu0 0.0
    %614 = vmatprep.subr.mxu0 0.0
    %615 = vmatpush1.msra.mxu0 0.0
    %616 = vmatprep.subr.mxu0 0.0
    %617 = vmatpush1.msra.mxu0 0.0
    %618 = vmatprep.subr.mxu0 0.0
    %619 = vmatpush1.msra.mxu0 0.0
    %620 = vmatprep.mubr.f32.mxu0 0.0
    %621 = vmatmul.mubr.f32.gmra.mrb[0].mxu0 %v554
    %v622 = vpop.f32.mrb[0].mxu0
    %v623 = vadd.f32 0.0, %v622
    %v624 = vpop.f32.mrb[0].mxu0
    %625 = vdwg.mxu0
    %v626 = vadd.f32 %v550, %v623
    %v627 = vtanh.pop %v626
    %v628 = vxor.u32 %v626, 2147483648
    %v629 = vmul.f32 %v628, 1.442695
    %v630 = vpow.pop %v629
    %v631 = vadd.f32 %v630, 1.0
    %v632 = vrcp.pop %v631
    %v633 = vmul.f32 1.0, %v632
    %v634 = vsel %vm31, %v627, %v633
    %v635 = vmul.f32 %v634, %v542
    %637 = vrot.lane.b32.xlu0 %v634, 64
    %v638 = vpop.permute.xlu0 %637
    %v640 = vmul.f32 %v634, %v638
    %642 = vrot.lane.b32.xlu0 %v640, 32
    %v643 = vpop.permute.xlu0 %642
    %v645 = vadd.f32 %v635, %v643
    %v646 = vtanh.pop %v645
    %648 = vrot.lane.b32.xlu0 %v646, 64
    %v649 = vpop.permute.xlu0 %648
    %v651 = vmul.f32 %v634, %v649
    %s652 = scalar_lea.vmem %s0, 48
    %v653 = vld [vmem:[%s652] sm:$0xff]
    %655 = vrot.lane.b32.xlu0 %v651, 32
    %v656 = vpop.permute.xlu0 %655
    %v657 = vsel %vm37, %v656, 0
    %659 = vmatprep.subr.mxu0 0.0
    %660 = vmatpush1.msra.mxu0 %v33
    %661 = vmatprep.subr.mxu0 0.0
    %662 = vmatpush1.msra.mxu0 %v34
    %663 = vmatprep.subr.mxu0 0.0
    %664 = vmatpush1.msra.mxu0 %v35
    %665 = vmatprep.subr.mxu0 0.0
    %666 = vmatpush1.msra.mxu0 %v36
    %667 = vmatprep.subr.mxu0 0.0
    %668 = vmatpush1.msra.mxu0 0.0
    %669 = vmatprep.subr.mxu0 0.0
    %670 = vmatpush1.msra.mxu0 0.0
    %671 = vmatprep.subr.mxu0 0.0
    %672 = vmatpush1.msra.mxu0 0.0
    %673 = vmatprep.subr.mxu0 0.0
    %674 = vmatpush1.msra.mxu0 0.0
    %675 = vmatprep.subr.mxu0 0.0
    %676 = vmatpush1.msra.mxu0 0.0
    %677 = vmatprep.subr.mxu0 0.0
    %678 = vmatpush1.msra.mxu0 0.0
    %679 = vmatprep.subr.mxu0 0.0
    %680 = vmatpush1.msra.mxu0 0.0
    %681 = vmatprep.subr.mxu0 0.0
    %682 = vmatpush1.msra.mxu0 0.0
    %683 = vmatprep.subr.mxu0 0.0
    %684 = vmatpush1.msra.mxu0 0.0
    %685 = vmatprep.subr.mxu0 0.0
    %686 = vmatpush1.msra.mxu0 0.0
    %687 = vmatprep.subr.mxu0 0.0
    %688 = vmatpush1.msra.mxu0 0.0
    %689 = vmatprep.subr.mxu0 0.0
    %690 = vmatpush1.msra.mxu0 0.0
    %691 = vmatprep.subr.mxu0 0.0
    %692 = vmatpush1.msra.mxu0 0.0
    %693 = vmatprep.subr.mxu0 0.0
    %694 = vmatpush1.msra.mxu0 0.0
    %695 = vmatprep.subr.mxu0 0.0
    %696 = vmatpush1.msra.mxu0 0.0
    %697 = vmatprep.subr.mxu0 0.0
    %698 = vmatpush1.msra.mxu0 0.0
    %699 = vmatprep.subr.mxu0 0.0
    %700 = vmatpush1.msra.mxu0 0.0
    %701 = vmatprep.subr.mxu0 0.0
    %702 = vmatpush1.msra.mxu0 0.0
    %703 = vmatprep.subr.mxu0 0.0
    %704 = vmatpush1.msra.mxu0 0.0
    %705 = vmatprep.subr.mxu0 0.0
    %706 = vmatpush1.msra.mxu0 0.0
    %707 = vmatprep.subr.mxu0 0.0
    %708 = vmatpush1.msra.mxu0 0.0
    %709 = vmatprep.subr.mxu0 0.0
    %710 = vmatpush1.msra.mxu0 0.0
    %711 = vmatprep.subr.mxu0 0.0
    %712 = vmatpush1.msra.mxu0 0.0
    %713 = vmatprep.subr.mxu0 0.0
    %714 = vmatpush1.msra.mxu0 0.0
    %715 = vmatprep.subr.mxu0 0.0
    %716 = vmatpush1.msra.mxu0 0.0
    %717 = vmatprep.subr.mxu0 0.0
    %718 = vmatpush1.msra.mxu0 0.0
    %719 = vmatprep.subr.mxu0 0.0
    %720 = vmatpush1.msra.mxu0 0.0
    %721 = vmatprep.subr.mxu0 0.0
    %722 = vmatpush1.msra.mxu0 0.0
    %723 = vmatprep.mubr.f32.mxu0 0.0
    %724 = vmatmul.mubr.f32.gmra.mrb[0].mxu0 %v657
    %v725 = vpop.f32.mrb[0].mxu0
    %v726 = vadd.f32 0.0, %v725
    %v727 = vpop.f32.mrb[0].mxu0
    %728 = vdwg.mxu0
    %v729 = vadd.f32 %v653, %v726
    %v730 = vtanh.pop %v729
    %v731 = vxor.u32 %v729, 2147483648
    %v732 = vmul.f32 %v731, 1.442695
    %v733 = vpow.pop %v732
    %v734 = vadd.f32 %v733, 1.0
    %v735 = vrcp.pop %v734
    %v736 = vmul.f32 1.0, %v735
    %v737 = vsel %vm31, %v730, %v736
    %v738 = vmul.f32 %v737, %v645
    %740 = vrot.lane.b32.xlu0 %v737, 64
    %v741 = vpop.permute.xlu0 %740
    %v743 = vmul.f32 %v737, %v741
    %745 = vrot.lane.b32.xlu0 %v743, 32
    %v746 = vpop.permute.xlu0 %745
    %v748 = vadd.f32 %v738, %v746
    %v749 = vtanh.pop %v748
    %751 = vrot.lane.b32.xlu0 %v749, 64
    %v752 = vpop.permute.xlu0 %751
    %v754 = vmul.f32 %v737, %v752
    %s755 = scalar_lea.vmem %s0, 56
    %v756 = vld [vmem:[%s755] sm:$0xff]
    %758 = vrot.lane.b32.xlu0 %v754, 32
    %v759 = vpop.permute.xlu0 %758
    %v760 = vsel %vm37, %v759, 0
    %762 = vmatprep.subr.mxu0 0.0
    %763 = vmatpush1.msra.mxu0 %v33
    %764 = vmatprep.subr.mxu0 0.0
    %765 = vmatpush1.msra.mxu0 %v34
    %766 = vmatprep.subr.mxu0 0.0
    %767 = vmatpush1.msra.mxu0 %v35
    %768 = vmatprep.subr.mxu0 0.0
    %769 = vmatpush1.msra.mxu0 %v36
    %770 = vmatprep.subr.mxu0 0.0
    %771 = vmatpush1.msra.mxu0 0.0
    %772 = vmatprep.subr.mxu0 0.0
    %773 = vmatpush1.msra.mxu0 0.0
    %774 = vmatprep.subr.mxu0 0.0
    %775 = vmatpush1.msra.mxu0 0.0
    %776 = vmatprep.subr.mxu0 0.0
    %777 = vmatpush1.msra.mxu0 0.0
    %778 = vmatprep.subr.mxu0 0.0
    %779 = vmatpush1.msra.mxu0 0.0
    %780 = vmatprep.subr.mxu0 0.0
    %781 = vmatpush1.msra.mxu0 0.0
    %782 = vmatprep.subr.mxu0 0.0
    %783 = vmatpush1.msra.mxu0 0.0
    %784 = vmatprep.subr.mxu0 0.0
    %785 = vmatpush1.msra.mxu0 0.0
    %786 = vmatprep.subr.mxu0 0.0
    %787 = vmatpush1.msra.mxu0 0.0
    %788 = vmatprep.subr.mxu0 0.0
    %789 = vmatpush1.msra.mxu0 0.0
    %790 = vmatprep.subr.mxu0 0.0
    %791 = vmatpush1.msra.mxu0 0.0
    %792 = vmatprep.subr.mxu0 0.0
    %793 = vmatpush1.msra.mxu0 0.0
    %794 = vmatprep.subr.mxu0 0.0
    %795 = vmatpush1.msra.mxu0 0.0
    %796 = vmatprep.subr.mxu0 0.0
    %797 = vmatpush1.msra.mxu0 0.0
    %798 = vmatprep.subr.mxu0 0.0
    %799 = vmatpush1.msra.mxu0 0.0
    %800 = vmatprep.subr.mxu0 0.0
    %801 = vmatpush1.msra.mxu0 0.0
    %802 = vmatprep.subr.mxu0 0.0
    %803 = vmatpush1.msra.mxu0 0.0
    %804 = vmatprep.subr.mxu0 0.0
    %805 = vmatpush1.msra.mxu0 0.0
    %806 = vmatprep.subr.mxu0 0.0
    %807 = vmatpush1.msra.mxu0 0.0
    %808 = vmatprep.subr.mxu0 0.0
    %809 = vmatpush1.msra.mxu0 0.0
    %810 = vmatprep.subr.mxu0 0.0
    %811 = vmatpush1.msra.mxu0 0.0
    %812 = vmatprep.subr.mxu0 0.0
    %813 = vmatpush1.msra.mxu0 0.0
    %814 = vmatprep.subr.mxu0 0.0
    %815 = vmatpush1.msra.mxu0 0.0
    %816 = vmatprep.subr.mxu0 0.0
    %817 = vmatpush1.msra.mxu0 0.0
    %818 = vmatprep.subr.mxu0 0.0
    %819 = vmatpush1.msra.mxu0 0.0
    %820 = vmatprep.subr.mxu0 0.0
    %821 = vmatpush1.msra.mxu0 0.0
    %822 = vmatprep.subr.mxu0 0.0
    %823 = vmatpush1.msra.mxu0 0.0
    %824 = vmatprep.subr.mxu0 0.0
    %825 = vmatpush1.msra.mxu0 0.0
    %826 = vmatprep.mubr.f32.mxu0 0.0
    %827 = vmatmul.mubr.f32.gmra.mrb[0].mxu0 %v760
    %v828 = vpop.f32.mrb[0].mxu0
    %v829 = vadd.f32 0.0, %v828
    %v830 = vpop.f32.mrb[0].mxu0
    %831 = vdwg.mxu0
    %v832 = vadd.f32 %v756, %v829
    %v833 = vtanh.pop %v832
    %v834 = vxor.u32 %v832, 2147483648
    %v835 = vmul.f32 %v834, 1.442695
    %v836 = vpow.pop %v835
    %v837 = vadd.f32 %v836, 1.0
    %v838 = vrcp.pop %v837
    %v839 = vmul.f32 1.0, %v838
    %v840 = vsel %vm31, %v833, %v839
    %v841 = vmul.f32 %v840, %v748
    %843 = vrot.lane.b32.xlu0 %v840, 64
    %v844 = vpop.permute.xlu0 %843
    %v846 = vmul.f32 %v840, %v844
    %848 = vrot.lane.b32.xlu0 %v846, 32
    %v849 = vpop.permute.xlu0 %848
    %v851 = vadd.f32 %v841, %v849
    %v852 = vtanh.pop %v851
    %854 = vrot.lane.b32.xlu0 %v852, 64
    %v855 = vpop.permute.xlu0 %854
    %v857 = vmul.f32 %v840, %v855
    %v858 = vld [vmem:[%s2] sm:$0xff]
    %v859 = vtanh.pop %v858
    %v860 = vxor.u32 %v858, 2147483648
    %v861 = vmul.f32 %v860, 1.442695
    %v862 = vpow.pop %v861
    %v863 = vadd.f32 %v862, 1.0
    %v864 = vrcp.pop %v863
    %v865 = vmul.f32 1.0, %v864
    %v866 = vsel %vm31, %v859, %v865
    %868 = vrot.lane.b32.xlu0 %v866, 64
    %v869 = vpop.permute.xlu0 %868
    %v871 = vmul.f32 %v866, %v869
    %v872 = vtanh.pop %v871
    %874 = vrot.lane.b32.xlu0 %v872, 96
    %v875 = vpop.permute.xlu0 %874
    %v877 = vmul.f32 %v866, %v875
    %879 = vrot.lane.b32.xlu0 %v857, 32
    %v880 = vpop.permute.xlu0 %879
    %883 = vrot.lane.b32.xlu0 %v877, 64
    %v884 = vpop.permute.xlu0 %883
    %v886 = vsel %vm37, %v880, %v884
    %v887 = vld [vmem:[%s3] sm:$0xff]
    %v888 = vld [vmem:[%s3 + $0x8] sm:$0xff]
    %v889 = vld [vmem:[%s3 + $0x10] sm:$0xff]
    %v890 = vld [vmem:[%s3 + $0x18] sm:$0xff]
    %v891 = vld [vmem:[%s3 + $0x20] sm:$0xff]
    %v892 = vld [vmem:[%s3 + $0x28] sm:$0xff]
    %v893 = vld [vmem:[%s3 + $0x30] sm:$0xff]
    %v894 = vld [vmem:[%s3 + $0x38] sm:$0xff]
    %v895 = vld [vmem:[%s4] sm:$0x1]
    %v897 = vlaneseq
    %v898 = vshrl.u32 %v897, 7
    %v899 = vsub.s32 0, %v898
    %v900 = vrot.slane %v895, %v899
    %vm902 = vcmask 523264
    %v904 = vsel %vm902, %v886, 0
    %906 = vmatprep.subr.mxu0 0.0
    %907 = vmatpush1.msra.mxu0 %v887
    %908 = vmatprep.subr.mxu0 0.0
    %909 = vmatpush1.msra.mxu0 %v888
    %910 = vmatprep.subr.mxu0 0.0
    %911 = vmatpush1.msra.mxu0 %v889
    %912 = vmatprep.subr.mxu0 0.0
    %913 = vmatpush1.msra.mxu0 %v890
    %914 = vmatprep.subr.mxu0 0.0
    %915 = vmatpush1.msra.mxu0 %v891
    %916 = vmatprep.subr.mxu0 0.0
    %917 = vmatpush1.msra.mxu0 %v892
    %918 = vmatprep.subr.mxu0 0.0
    %919 = vmatpush1.msra.mxu0 %v893
    %920 = vmatprep.subr.mxu0 0.0
    %921 = vmatpush1.msra.mxu0 %v894
    %922 = vmatprep.subr.mxu0 0.0
    %923 = vmatpush1.msra.mxu0 0.0
    %924 = vmatprep.subr.mxu0 0.0
    %925 = vmatpush1.msra.mxu0 0.0
    %926 = vmatprep.subr.mxu0 0.0
    %927 = vmatpush1.msra.mxu0 0.0
    %928 = vmatprep.subr.mxu0 0.0
    %929 = vmatpush1.msra.mxu0 0.0
    %930 = vmatprep.subr.mxu0 0.0
    %931 = vmatpush1.msra.mxu0 0.0
    %932 = vmatprep.subr.mxu0 0.0
    %933 = vmatpush1.msra.mxu0 0.0
    %934 = vmatprep.subr.mxu0 0.0
    %935 = vmatpush1.msra.mxu0 0.0
    %936 = vmatprep.subr.mxu0 0.0
    %937 = vmatpush1.msra.mxu0 0.0
    %938 = vmatprep.subr.mxu0 0.0
    %939 = vmatpush1.msra.mxu0 0.0
    %940 = vmatprep.subr.mxu0 0.0
    %941 = vmatpush1.msra.mxu0 0.0
    %942 = vmatprep.subr.mxu0 0.0
    %943 = vmatpush1.msra.mxu0 0.0
    %944 = vmatprep.subr.mxu0 0.0
    %945 = vmatpush1.msra.mxu0 0.0
    %946 = vmatprep.subr.mxu0 0.0
    %947 = vmatpush1.msra.mxu0 0.0
    %948 = vmatprep.subr.mxu0 0.0
    %949 = vmatpush1.msra.mxu0 0.0
    %950 = vmatprep.subr.mxu0 0.0
    %951 = vmatpush1.msra.mxu0 0.0
    %952 = vmatprep.subr.mxu0 0.0
    %953 = vmatpush1.msra.mxu0 0.0
    %954 = vmatprep.subr.mxu0 0.0
    %955 = vmatpush1.msra.mxu0 0.0
    %956 = vmatprep.subr.mxu0 0.0
    %957 = vmatpush1.msra.mxu0 0.0
    %958 = vmatprep.subr.mxu0 0.0
    %959 = vmatpush1.msra.mxu0 0.0
    %960 = vmatprep.subr.mxu0 0.0
    %961 = vmatpush1.msra.mxu0 0.0
    %962 = vmatprep.subr.mxu0 0.0
    %963 = vmatpush1.msra.mxu0 0.0
    %964 = vmatprep.subr.mxu0 0.0
    %965 = vmatpush1.msra.mxu0 0.0
    %966 = vmatprep.subr.mxu0 0.0
    %967 = vmatpush1.msra.mxu0 0.0
    %968 = vmatprep.subr.mxu0 0.0
    %969 = vmatpush1.msra.mxu0 0.0
    %970 = vmatprep.mubr.f32.mxu0 0.0
    %971 = vmatmul.mubr.f32.gmra.mrb[0].mxu0 %v904
    %v972 = vpop.f32.mrb[0].mxu0
    %v973 = vadd.f32 %v900, %v972
    %v974 = vpop.f32.mrb[0].mxu0
    %975 = vdwg.mxu0
    %v976 = vmax.f32 %v973, 0.0
    %v977 = vld [vmem:[%s5] sm:$0xff]
    %v978 = vld [vmem:[%s5 + $0x8] sm:$0xff]
    %v979 = vld [vmem:[%s5 + $0x10] sm:$0xff]
    %v980 = vld [vmem:[%s5 + $0x18] sm:$0x3f]
    %v981 = vld [vmem:[%s6] sm:$0x1]
    %v983 = vlaneseq
    %v984 = vshrl.u32 %v983, 7
    %v985 = vsub.s32 0, %v984
    %v986 = vrot.slane %v981, %v985
    %vm988 = vcmask 244736
    %v990 = vsel %vm988, %v976, 0
    %vm992 = vcmask 1045504
    %v994 = vsel %vm992, %v980, 0
    %996 = vmatprep.subr.mxu0 0.0
    %997 = vmatpush1.msra.mxu0 %v977
    %998 = vmatprep.subr.mxu0 0.0
    %999 = vmatpush1.msra.mxu0 %v978
    %1000 = vmatprep.subr.mxu0 0.0
    %1001 = vmatpush1.msra.mxu0 %v979
    %1002 = vmatprep.subr.mxu0 0.0
    %1003 = vmatpush1.msra.mxu0 %v994
    %1004 = vmatprep.subr.mxu0 0.0
    %1005 = vmatpush1.msra.mxu0 0.0
    %1006 = vmatprep.subr.mxu0 0.0
    %1007 = vmatpush1.msra.mxu0 0.0
    %1008 = vmatprep.subr.mxu0 0.0
    %1009 = vmatpush1.msra.mxu0 0.0
    %1010 = vmatprep.subr.mxu0 0.0
    %1011 = vmatpush1.msra.mxu0 0.0
    %1012 = vmatprep.subr.mxu0 0.0
    %1013 = vmatpush1.msra.mxu0 0.0
    %1014 = vmatprep.subr.mxu0 0.0
    %1015 = vmatpush1.msra.mxu0 0.0
    %1016 = vmatprep.subr.mxu0 0.0
    %1017 = vmatpush1.msra.mxu0 0.0
    %1018 = vmatprep.subr.mxu0 0.0
    %1019 = vmatpush1.msra.mxu0 0.0
    %1020 = vmatprep.subr.mxu0 0.0
    %1021 = vmatpush1.msra.mxu0 0.0
    %1022 = vmatprep.subr.mxu0 0.0
    %1023 = vmatpush1.msra.mxu0 0.0
    %1024 = vmatprep.subr.mxu0 0.0
    %1025 = vmatpush1.msra.mxu0 0.0
    %1026 = vmatprep.subr.mxu0 0.0
    %1027 = vmatpush1.msra.mxu0 0.0
    %1028 = vmatprep.subr.mxu0 0.0
    %1029 = vmatpush1.msra.mxu0 0.0
    %1030 = vmatprep.subr.mxu0 0.0
    %1031 = vmatpush1.msra.mxu0 0.0
    %1032 = vmatprep.subr.mxu0 0.0
    %1033 = vmatpush1.msra.mxu0 0.0
    %1034 = vmatprep.subr.mxu0 0.0
    %1035 = vmatpush1.msra.mxu0 0.0
    %1036 = vmatprep.subr.mxu0 0.0
    %1037 = vmatpush1.msra.mxu0 0.0
    %1038 = vmatprep.subr.mxu0 0.0
    %1039 = vmatpush1.msra.mxu0 0.0
    %1040 = vmatprep.subr.mxu0 0.0
    %1041 = vmatpush1.msra.mxu0 0.0
    %1042 = vmatprep.subr.mxu0 0.0
    %1043 = vmatpush1.msra.mxu0 0.0
    %1044 = vmatprep.subr.mxu0 0.0
    %1045 = vmatpush1.msra.mxu0 0.0
    %1046 = vmatprep.subr.mxu0 0.0
    %1047 = vmatpush1.msra.mxu0 0.0
    %1048 = vmatprep.subr.mxu0 0.0
    %1049 = vmatpush1.msra.mxu0 0.0
    %1050 = vmatprep.subr.mxu0 0.0
    %1051 = vmatpush1.msra.mxu0 0.0
    %1052 = vmatprep.subr.mxu0 0.0
    %1053 = vmatpush1.msra.mxu0 0.0
    %1054 = vmatprep.subr.mxu0 0.0
    %1055 = vmatpush1.msra.mxu0 0.0
    %1056 = vmatprep.subr.mxu0 0.0
    %1057 = vmatpush1.msra.mxu0 0.0
    %1058 = vmatprep.subr.mxu0 0.0
    %1059 = vmatpush1.msra.mxu0 0.0
    %1060 = vmatprep.mubr.f32.mxu0 0.0
    %1061 = vmatmul.mubr.f32.gmra.mrb[0].mxu0 %v990
    %v1062 = vpop.f32.mrb[0].mxu0
    %v1063 = vadd.f32 %v986, %v1062
    %v1064 = vpop.f32.mrb[0].mxu0
    %1065 = vdwg.mxu0
    %vm1066 = vcmask 64512
    %1067 = vst.msk [vmem:[#allocation2] sm:$0xff] %vm1066, %v1063
    // Predicated region
    $region30: #{tpu_custom_call.1} parent=1 // pred_check
      _
    $region31: #{tpu_custom_call.1} parent=1 // pred_check_branch
      %1069 = sbr.rel (0) target = $region33
    $region32: #{tpu_custom_call.1} parent=1 // pred_region
      %s1071 = ssub.s32 128, 128
      %1072 = vsyncadd [#allocation3], %s1071
      %s1074 = sshll.u32 [#allocation2], 4
      %s1075 = int_to_ptr.vmem [resolvable:$true] %s1074
      %1077 = dma.vmem_to_hbm [thread:$0]  %s1075, 128, %s7, [#allocation3]
    $region33: #{tpu_custom_call.1} parent=1 // pred_fallthru
      _
    // Predicated region
    $region34: #{tpu_custom_call.1} parent=1 // pred_check
      _
    $region35: #{tpu_custom_call.1} parent=1 // pred_check_branch
      %1079 = sbr.rel (0) target = $region37
    $region36: #{tpu_custom_call.1} parent=1 // pred_region
      %1080 = dma.done [#allocation3], 128
    $region37: #{tpu_custom_call.1} parent=1 // pred_fallthru
      _
    %1081 = vsyncpa [#allocation3], 1

</llo_original>
